<compile_context>
chip_gen: v5e
topology: v5e:2x2
jax: 0.10.0
libtpu: 0.0.40
codegen_flags: <defaults>
</compile_context>

<pallas_src>
import jax
import jax.numpy as jnp
from jax.experimental import pallas as pl
from jax.experimental.pallas import tpu as pltpu


def _round_up(x, m):
    return ((x + m - 1) // m) * m


def _make_ce_kernel(B, C, tile_b, tile_c, num_c_tiles):
    mask_cols = (C % tile_c) != 0   # only the last class tile can have padded lanes
    mask_rows = (B % tile_b) != 0   # only the last batch tile can have padded rows

    def kernel(x_ref, t_ref, o_ref, m_ref, l_ref, tgt_ref):
        i = pl.program_id(0)        # batch-tile index ("parallel")
        k = pl.program_id(1)        # class-tile index (reduction, innermost)

        @pl.when(k == 0)
        def _init():
            m_ref[...] = jnp.full((tile_b, 1), -jnp.inf, dtype=jnp.float32)
            l_ref[...] = jnp.zeros((tile_b, 1), dtype=jnp.float32)
            tgt_ref[...] = jnp.zeros((tile_b, 1), dtype=jnp.float32)

        x_nat = x_ref[...]                                   # (tile_b, tile_c) native dtype
        t = t_ref[...]                                       # (tile_b, 1) int32
        # (1, tile_c) iota + scalar offset; broadcast does the rest (no big int temp).
        col = jax.lax.broadcasted_iota(jnp.int32, (1, tile_c), 1) + k * tile_c

        def update(x_m):
            # Online logsumexp update with f32 accumulators in VMEM scratch.
            m_prev = m_ref[...]
            m_new = jnp.maximum(m_prev, jnp.max(x_m, axis=-1, keepdims=True))
            alpha = jnp.exp(m_prev - m_new)
            p_sum = jnp.sum(jnp.exp(x_m - m_new), axis=-1, keepdims=True)
            l_ref[...] = alpha * l_ref[...] + p_sum
            m_ref[...] = m_new

        x_f32 = x_nat.astype(jnp.float32)
        if not mask_cols:
            # Shapes divide evenly along classes: no lane mask anywhere.
            update(x_f32)
        else:
            last = num_c_tiles - 1

            @pl.when(k < last)
            def _hot():
                update(x_f32)

            @pl.when(k == last)
            def _tail():
                update(jnp.where(col < C, x_f32, -jnp.inf))

        # Target-logit contribution from this class tile: one-hot select in the
        # native dtype (exact, a single nonzero term), upcast after the row-sum.
        # Padded lanes (col >= C) never match since targets are < C; padded batch
        # rows may accumulate garbage but are zeroed by the finalize select.
        sel = jnp.where(col == t, x_nat, jnp.zeros((), dtype=x_nat.dtype))
        tgt_ref[...] += jnp.sum(sel, axis=-1, keepdims=True).astype(jnp.float32)

        @pl.when(k == num_c_tiles - 1)
        def _finalize():
            lse = m_ref[...] + jnp.log(l_ref[...])            # (tile_b, 1)
            per_sample = lse - tgt_ref[...]                   # -log p(target)
            if mask_rows:
                row = jax.lax.broadcasted_iota(jnp.int32, (tile_b, 1), 0) + i * tile_b
                per_sample = jnp.where(row < B, per_sample, 0.0)  # true select, not *mask
            o_ref[...] = per_sample

    return kernel


def _tile_params(B, C):
    """Chip-aware tile / VMEM-limit selection (static, shape-based)."""
    try:
        kind = jax.devices()[0].device_kind.lower()
    except Exception:  # pragma: no cover - defensive
        kind = ""
    # 128 MiB-VMEM parts (v5e/v5p/v6e) can afford bigger blocks; default stays
    # within v7x's 64 MiB-per-TC budget (2x double-buffered 256x2048 f32 input
    # plus a handful of f32 block temporaries << 48 MiB).
    big_vmem = ("v5" in kind or "v6" in kind) and "v7" not in kind
    cap_b = 256
    cap_c = 4096 if big_vmem else 2048
    vmem_limit = (96 if big_vmem else 48) * 1024 * 1024

    tile_c = C if C <= cap_c else cap_c
    if B <= 8:
        tile_b = B
    else:
        # Guarantee >=2 batch tiles so the "parallel" axis can shard across both
        # TensorCores on v7x; neutral on single-TC chips.
        tile_b = min(cap_b, _round_up(-(-B // 2), 8))
    return tile_b, tile_c, vmem_limit


@jax.jit
def cross_entropy_loss(inputs, targets):
    """inputs: (B, C) logits (any float dtype); targets: (B,) int class indices.

    Returns the scalar mean cross-entropy loss (matches nn.CrossEntropyLoss()).
    """
    B, C = inputs.shape
    tile_b, tile_c, vmem_limit = _tile_params(B, C)
    num_b = pl.cdiv(B, tile_b)
    num_c = pl.cdiv(C, tile_c)

    t2d = targets.astype(jnp.int32).reshape(B, 1)
    kernel = _make_ce_kernel(B, C, tile_b, tile_c, num_c)

    per_sample = pl.pallas_call(
        kernel,
        out_shape=jax.ShapeDtypeStruct((num_b * tile_b, 1), jnp.float32),
        grid_spec=pltpu.PrefetchScalarGridSpec(
            num_scalar_prefetch=0,
            grid=(num_b, num_c),
            in_specs=[
                pl.BlockSpec((tile_b, tile_c), lambda i, k: (i, k)),  # logits tile
                pl.BlockSpec((tile_b, 1), lambda i, k: (i, 0)),       # targets tile
            ],
            # Lane-sparse (tile_b, 1) output kept intentionally: output bytes are
            # ~1/C of input bytes, so a lane-dense rework is not worth it.
            out_specs=pl.BlockSpec((tile_b, 1), lambda i, k: (i, 0)),
            scratch_shapes=[
                pltpu.VMEM((tile_b, 1), jnp.float32),   # running max   m
                pltpu.VMEM((tile_b, 1), jnp.float32),   # running sum   l
                pltpu.VMEM((tile_b, 1), jnp.float32),   # running target logit
            ],
        ),
        compiler_params=pltpu.CompilerParams(
            dimension_semantics=("parallel", "arbitrary"),
            vmem_limit_bytes=vmem_limit,
        ),
    )(inputs, t2d)

    # Padded rows were zeroed in-kernel; mean over the true batch size.
    return jnp.sum(per_sample) / jnp.float32(B)


if __name__ == "__main__":
    key = jax.random.PRNGKey(0)
    k1, k2, k3, k4 = jax.random.split(key, 4)

    # Small base case (full-B / full-C blocks; no padding paths).
    B, C = 8, 32
    logits = jax.random.normal(k1, (B, C), dtype=jnp.float32)
    targets = jax.random.randint(k2, (B,), 0, C, dtype=jnp.int32)
    loss = cross_entropy_loss(logits, targets)
    jax.block_until_ready(loss)
    ref = -jnp.mean(jax.nn.log_softmax(logits, axis=-1)[jnp.arange(B), targets])
    assert jnp.allclose(loss, ref, atol=1e-5, rtol=1e-5), (loss, ref)

    # Second small case: B not a multiple of tile_b -> exercises padded-batch-row path.
    B2, C2 = 20, 48
    logits2 = jax.random.normal(k3, (B2, C2), dtype=jnp.float32)
    targets2 = jax.random.randint(k4, (B2,), 0, C2, dtype=jnp.int32)
    loss2 = cross_entropy_loss(logits2, targets2)
    jax.block_until_ready(loss2)
    ref2 = -jnp.mean(jax.nn.log_softmax(logits2, axis=-1)[jnp.arange(B2), targets2])
    assert jnp.allclose(loss2, ref2, atol=1e-5, rtol=1e-5), (loss2, ref2)

    print("KERNEL_OK")
</pallas_src>

<mosaic_0001>
module attributes {stable_mosaic.version = 11 : i64} {
  func.func @kernel(%arg0: i32, %arg1: i32, %arg2: memref<8x32xf32, #tpu.memory_space<vmem>>, %arg3: memref<8x1xi32, #tpu.memory_space<vmem>>, %arg4: memref<8x1xf32, #tpu.memory_space<vmem>>, %arg5: memref<8x1xf32, #tpu.memory_space<vmem>>, %arg6: memref<8x1xf32, #tpu.memory_space<vmem>>, %arg7: memref<8x1xf32, #tpu.memory_space<vmem>>) attributes {dimension_semantics = [#tpu.dimension_semantics<parallel>, #tpu.dimension_semantics<arbitrary>], iteration_bounds = array<i64: 1, 1>, scalar_prefetch = 0 : i64, scratch_operands = 3 : i64, tpu.core_type = #tpu.core_type<tc>, window_params = [{transform_indices = @transform_0, window_bounds = array<i64: 8, 32>}, {transform_indices = @transform_1, window_bounds = array<i64: 8, 1>}, {transform_indices = @transform_2, window_bounds = array<i64: 8, 1>}]} {
    %c0_i32 = arith.constant 0 : i32
    %0 = arith.cmpi eq, %arg1, %c0_i32 : i32
    %1 = arith.extui %0 : i1 to i32
    %c0_i32_0 = arith.constant 0 : i32
    %2 = arith.cmpi ne, %1, %c0_i32_0 : i32
    scf.if %2 {
      %cst_21 = arith.constant 0xFF800000 : f32
      %38 = vector.broadcast %cst_21 : f32 to vector<8x1xf32>
      %c0_22 = arith.constant 0 : index
      %c0_23 = arith.constant 0 : index
      %39 = vector.load %arg5[%c0_22, %c0_23] : memref<8x1xf32, #tpu.memory_space<vmem>>, vector<8x1xf32>
      tpu.vector_store %arg5[%c0_22, %c0_23], %38 {strides = array<i32>} : memref<8x1xf32, #tpu.memory_space<vmem>>, vector<8x1xf32>,
      %cst_24 = arith.constant 0.000000e+00 : f32
      %40 = vector.broadcast %cst_24 : f32 to vector<8x1xf32>
      %c0_25 = arith.constant 0 : index
      %c0_26 = arith.constant 0 : index
      %41 = vector.load %arg6[%c0_25, %c0_26] : memref<8x1xf32, #tpu.memory_space<vmem>>, vector<8x1xf32>
      tpu.vector_store %arg6[%c0_25, %c0_26], %40 {strides = array<i32>} : memref<8x1xf32, #tpu.memory_space<vmem>>, vector<8x1xf32>,
      %cst_27 = arith.constant 0.000000e+00 : f32
      %42 = vector.broadcast %cst_27 : f32 to vector<8x1xf32>
      %c0_28 = arith.constant 0 : index
      %c0_29 = arith.constant 0 : index
      %43 = vector.load %arg7[%c0_28, %c0_29] : memref<8x1xf32, #tpu.memory_space<vmem>>, vector<8x1xf32>
      tpu.vector_store %arg7[%c0_28, %c0_29], %42 {strides = array<i32>} : memref<8x1xf32, #tpu.memory_space<vmem>>, vector<8x1xf32>,
    } else {
    }
    %c0 = arith.constant 0 : index
    %c0_1 = arith.constant 0 : index
    %3 = vector.load %arg2[%c0, %c0_1] : memref<8x32xf32, #tpu.memory_space<vmem>>, vector<8x32xf32>
    %c0_2 = arith.constant 0 : index
    %c0_3 = arith.constant 0 : index
    %4 = vector.load %arg3[%c0_2, %c0_3] : memref<8x1xi32, #tpu.memory_space<vmem>>, vector<8x1xi32>
    %5 = tpu.iota {dimensions = array<i32: 1>} : vector<1x32xi32>
    %c32_i32 = arith.constant 32 : i32
    %6 = arith.muli %arg1, %c32_i32 : i32
    %7 = vector.broadcast %6 : i32 to vector<1x32xi32>
    %8 = arith.addi %5, %7 : vector<1x32xi32>
    %c0_4 = arith.constant 0 : index
    %c0_5 = arith.constant 0 : index
    %9 = vector.load %arg5[%c0_4, %c0_5] : memref<8x1xf32, #tpu.memory_space<vmem>>, vector<8x1xf32>
    %cst = arith.constant dense<0xFF800000> : vector<8xf32>
    %10 = vector.multi_reduction <maximumf>, %3, %cst [1] : vector<8x32xf32> to vector<8xf32>
    %11 = vector.shape_cast %10 : vector<8xf32> to vector<8x1xf32>
    %12 = arith.maximumf %9, %11 : vector<8x1xf32>
    %13 = arith.subf %9, %12 : vector<8x1xf32>
    %14 = math.exp %13 : vector<8x1xf32>
    %15 = vector.broadcast %12 : vector<8x1xf32> to vector<8x32xf32>
    %16 = arith.subf %3, %15 : vector<8x32xf32>
    %17 = math.exp %16 : vector<8x32xf32>
    %cst_6 = arith.constant dense<0.000000e+00> : vector<8xf32>
    %18 = vector.multi_reduction <add>, %17, %cst_6 [1] : vector<8x32xf32> to vector<8xf32>
    %19 = vector.shape_cast %18 : vector<8xf32> to vector<8x1xf32>
    %c0_7 = arith.constant 0 : index
    %c0_8 = arith.constant 0 : index
    %20 = vector.load %arg6[%c0_7, %c0_8] : memref<8x1xf32, #tpu.memory_space<vmem>>, vector<8x1xf32>
    %21 = arith.mulf %14, %20 : vector<8x1xf32>
    %22 = arith.addf %21, %19 : vector<8x1xf32>
    %c0_9 = arith.constant 0 : index
    %c0_10 = arith.constant 0 : index
    %23 = vector.load %arg6[%c0_9, %c0_10] : memref<8x1xf32, #tpu.memory_space<vmem>>, vector<8x1xf32>
    tpu.vector_store %arg6[%c0_9, %c0_10], %22 {strides = array<i32>} : memref<8x1xf32, #tpu.memory_space<vmem>>, vector<8x1xf32>,
    %c0_11 = arith.constant 0 : index
    %c0_12 = arith.constant 0 : index
    %24 = vector.load %arg5[%c0_11, %c0_12] : memref<8x1xf32, #tpu.memory_space<vmem>>, vector<8x1xf32>
    tpu.vector_store %arg5[%c0_11, %c0_12], %12 {strides = array<i32>} : memref<8x1xf32, #tpu.memory_space<vmem>>, vector<8x1xf32>,
    %25 = vector.broadcast %8 : vector<1x32xi32> to vector<8x32xi32>
    %26 = vector.broadcast %4 : vector<8x1xi32> to vector<8x32xi32>
    %27 = arith.cmpi eq, %25, %26 : vector<8x32xi32>
    %cst_13 = arith.constant 0.000000e+00 : f32
    %28 = vector.broadcast %cst_13 : f32 to vector<8x32xf32>
    %29 = arith.select %27, %3, %28 : vector<8x32xi1>, vector<8x32xf32>
    %c0_14 = arith.constant 0 : index
    %c0_15 = arith.constant 0 : index
    %30 = vector.load %arg7[%c0_14, %c0_15] : memref<8x1xf32, #tpu.memory_space<vmem>>, vector<8x1xf32>
    %cst_16 = arith.constant dense<0.000000e+00> : vector<8xf32>
    %31 = vector.multi_reduction <add>, %29, %cst_16 [1] : vector<8x32xf32> to vector<8xf32>
    %32 = vector.shape_cast %31 : vector<8xf32> to vector<8x1xf32>
    %33 = arith.addf %30, %32 : vector<8x1xf32>
    %c0_17 = arith.constant 0 : index
    %c0_18 = arith.constant 0 : index
    %34 = vector.load %arg7[%c0_17, %c0_18] : memref<8x1xf32, #tpu.memory_space<vmem>>, vector<8x1xf32>
    tpu.vector_store %arg7[%c0_17, %c0_18], %33 {strides = array<i32>} : memref<8x1xf32, #tpu.memory_space<vmem>>, vector<8x1xf32>,
    %c0_i32_19 = arith.constant 0 : i32
    %35 = arith.cmpi eq, %arg1, %c0_i32_19 : i32
    %36 = arith.extui %35 : i1 to i32
    %c0_i32_20 = arith.constant 0 : i32
    %37 = arith.cmpi ne, %36, %c0_i32_20 : i32
    scf.if %37 {
      %c0_21 = arith.constant 0 : index
      %c0_22 = arith.constant 0 : index
      %38 = vector.load %arg5[%c0_21, %c0_22] : memref<8x1xf32, #tpu.memory_space<vmem>>, vector<8x1xf32>
      %c0_23 = arith.constant 0 : index
      %c0_24 = arith.constant 0 : index
      %39 = vector.load %arg6[%c0_23, %c0_24] : memref<8x1xf32, #tpu.memory_space<vmem>>, vector<8x1xf32>
      %40 = math.log %39 : vector<8x1xf32>
      %41 = arith.addf %38, %40 : vector<8x1xf32>
      %c0_25 = arith.constant 0 : index
      %c0_26 = arith.constant 0 : index
      %42 = vector.load %arg7[%c0_25, %c0_26] : memref<8x1xf32, #tpu.memory_space<vmem>>, vector<8x1xf32>
      %43 = arith.subf %41, %42 : vector<8x1xf32>
      %c0_27 = arith.constant 0 : index
      %c0_28 = arith.constant 0 : index
      %44 = vector.load %arg4[%c0_27, %c0_28] : memref<8x1xf32, #tpu.memory_space<vmem>>, vector<8x1xf32>
      tpu.vector_store %arg4[%c0_27, %c0_28], %43 {strides = array<i32>} : memref<8x1xf32, #tpu.memory_space<vmem>>, vector<8x1xf32>,
    } else {
    }
    return
  }
  func.func @transform_0(%arg0: i32, %arg1: i32) -> (i32, i32) {
    %c0_i32 = arith.constant 0 : i32
    return %arg0, %arg1 : i32, i32
  }
  func.func @transform_1(%arg0: i32, %arg1: i32) -> (i32, i32) {
    %c0_i32 = arith.constant 0 : i32
    %c0_i32_0 = arith.constant 0 : i32
    return %arg0, %c0_i32 : i32, i32
  }
  func.func @transform_2(%arg0: i32, %arg1: i32) -> (i32, i32) {
    %c0_i32 = arith.constant 0 : i32
    %c0_i32_0 = arith.constant 0 : i32
    return %arg0, %c0_i32 : i32, i32
  }
}

</mosaic_0001>

<llo_original>
// kernel: cross_entropy_loss.1
$region0: #{cross_entropy_loss.1}
  #allocation0 [shape = 'u32[]', space=smem, size = 0x4, offset = 0x4, fixed_abs, tag = 'smem constant byte address 0x4 - core index']
  #allocation1 [shape = 'u32[72,128]{1,0:T(1,128)}', space=vmem, size = 0x9000, scoped, tag = 'internal scratch']
  #allocation2 [shape = 'f32[8,1]{1,0:T(8,128)}', space=vmem, size = 0x1000, scoped, tag = 'scratch operand']
  #allocation3 [shape = 'f32[8,1]{1,0:T(8,128)}', space=vmem, size = 0x1000, scoped, tag = 'scratch operand']
  #allocation4 [shape = 'f32[8,1]{1,0:T(8,128)}', space=vmem, size = 0x1000, scoped, tag = 'scratch operand']
  %s0 = inlined_call_operand.vmem [shape: f32[8,32], index: 0, kind: input, shape index: {}]
  %s1 = inlined_call_operand.vmem [shape: s32[8,1], index: 1, kind: input, shape index: {}]
  %s2 = inlined_call_operand.vmem [shape: f32[8,1], index: 2, kind: output, shape index: {}]
  %s3 = sld [smem:[#allocation0]]
  $region26: #{cross_entropy_loss.1} parent=0
    _
  %s5 = ssub.s32 1, %s3
  %s6 = scalar_select 0, %s5, %s3
  // Predicated region
  $region2: #{cross_entropy_loss.1} parent=0 // pred_check
    _
  $region3: #{cross_entropy_loss.1} parent=0 // pred_check_branch
    %8 = sbr.rel (0) target = $region5
  $region4: #{cross_entropy_loss.1} parent=0 // pred_region
    _
  $region5: #{cross_entropy_loss.1} parent=0 // pred_fallthru
    _
  // Predicated region
  $region6: #{cross_entropy_loss.1} parent=0 // pred_check
    _
  $region7: #{cross_entropy_loss.1} parent=0 // pred_check_branch
    %10 = sbr.rel (0) target = $region9
  $region8: #{cross_entropy_loss.1} parent=0 // pred_region
    _
  $region9: #{cross_entropy_loss.1} parent=0 // pred_fallthru
    _
  %p11 = scmp.eq.s32.totalorder 0, 0
  // Predicated region
  $region10: #{cross_entropy_loss.1} parent=0 // pred_check
    %p12 = pneg %p11
  $region11: #{cross_entropy_loss.1} parent=0 // pred_check_branch
    %14 = sbr.rel (%p12) target = $region13
  $region12: #{cross_entropy_loss.1} parent=0 // pred_region
    %vm15 = vcmask 7168
    %16 = vst.msk [vmem:[#allocation2] sm:$0xff] %vm15, -inf
    %17 = vst.msk [vmem:[#allocation3] sm:$0xff] %vm15, 0.0
    %18 = vst.msk [vmem:[#allocation4] sm:$0xff] %vm15, 0.0
  $region13: #{cross_entropy_loss.1} parent=0 // pred_fallthru
    _
  %v19 = vld [vmem:[%s0] sm:$0xff]
  %v20 = vld [vmem:[%s1] sm:$0xff]
  %v21 = vlaneseq
  %v22 = vand.u32 %v21, 127
  %s23 = smul.u32 0, 32
  %v24 = vstv %s23
  %v25 = vadd.s32 %v22, %v24
  %v26 = vld [vmem:[#allocation2] sm:$0xff]
  %vm27 = vcmask 261120
  %v28 = vsel %vm27, %v19, -inf
  %29 = vmax.xlane.f32.xlu0 %v28
  %v30 = vpop.xlane.xlu0 %29
  %v31 = vmax.f32 %v26, %v30
  %v32 = vsub.f32 %v26, %v31
  %v33 = vmul.f32 %v32, 1.442695
  %v34 = vpow.pop %v33
  %36 = vset.pattern.permute.xlu0 0
  %37 = vperm.xlu0 %36, %v31
  %v38 = vpop.permute.xlu0 %37
  %v40 = vsub.f32 %v19, %v38
  %v41 = vmul.f32 %v40, 1.442695
  %v42 = vpow.pop %v41
  %v43 = vsel %vm27, %v42, 0.0
  %44 = vadd.xlane.f32.xlu0 %v43
  %v45 = vpop.xlane.xlu0 %44
  %v46 = vld [vmem:[#allocation3] sm:$0xff]
  %v47 = vmul.f32 %v34, %v46
  %v48 = vadd.f32 %v47, %v45
  %vm49 = vcmask 7168
  %50 = vst.msk [vmem:[#allocation3] sm:$0xff] %vm49, %v48
  %51 = vst.msk [vmem:[#allocation2] sm:$0xff] %vm49, %v31
  %52 = vset.pattern.permute.xlu0 0
  %53 = vperm.xlu0 %52, %v20
  %v54 = vpop.permute.xlu0 %53
  %vm55 = vcmp.eq.s32.totalorder %v25, %v54
  %v56 = vsel %vm55, %v19, 0.0
  %v57 = vld [vmem:[#allocation4] sm:$0xff]
  %v58 = vsel %vm27, %v56, 0.0
  %59 = vadd.xlane.f32.xlu0 %v58
  %v60 = vpop.xlane.xlu0 %59
  %v61 = vadd.f32 %v57, %v60
  %62 = vst.msk [vmem:[#allocation4] sm:$0xff] %vm49, %v61
  // Predicated region
  $region14: #{cross_entropy_loss.1} parent=0 // pred_check
    %p63 = pneg %p11
  $region15: #{cross_entropy_loss.1} parent=0 // pred_check_branch
    %65 = sbr.rel (%p63) target = $region17
  $region16: #{cross_entropy_loss.1} parent=0 // pred_region
    %v66 = vld [vmem:[#allocation2] sm:$0xff]
    %v67 = vld [vmem:[#allocation3] sm:$0xff]
    %v68 = vlog2.pop %v67
    %v69 = vmul.f32 %v68, 0.6931472
    %v70 = vadd.f32 %v66, %v69
    %v71 = vld [vmem:[#allocation4] sm:$0xff]
    %v72 = vsub.f32 %v70, %v71
    %73 = vst.msk [vmem:[%s2] sm:$0xff] %vm49, %v72
  $region17: #{cross_entropy_loss.1} parent=0 // pred_fallthru
    _
  // Predicated region
  $region18: #{cross_entropy_loss.1} parent=0 // pred_check
    _
  $region19: #{cross_entropy_loss.1} parent=0 // pred_check_branch
    %75 = sbr.rel (0) target = $region21
  $region20: #{cross_entropy_loss.1} parent=0 // pred_region
    _
  $region21: #{cross_entropy_loss.1} parent=0 // pred_fallthru
    _
  // Predicated region
  $region22: #{cross_entropy_loss.1} parent=0 // pred_check
    _
  $region23: #{cross_entropy_loss.1} parent=0 // pred_check_branch
    %77 = sbr.rel (0) target = $region25
  $region24: #{cross_entropy_loss.1} parent=0 // pred_region
    _
  $region25: #{cross_entropy_loss.1} parent=0 // pred_fallthru
    _

</llo_original>
